<compile_context>
chip_gen: v6e
topology: v6e:2x2x1
jax: 0.10.0
libtpu: 0.0.40
codegen_flags: <defaults>
</compile_context>

<pallas_src>
import functools
from math import sqrt

import jax
import jax.numpy as jnp
from jax import lax
from jax.experimental import pallas as pl
from jax.experimental.pallas import tpu as pltpu


# ----------------------------------------------------------------------------
# Tiled linear (y = x @ W_t + b), P1 + P3 matmul pattern
# ----------------------------------------------------------------------------
def _linear_kernel(x_ref, w_ref, b_ref, o_ref, acc_ref):
    k = pl.program_id(2)

    @pl.when(k == 0)
    def _():
        acc_ref[...] = jnp.zeros_like(acc_ref)

    acc_ref[...] += jnp.dot(x_ref[...], w_ref[...],
                            preferred_element_type=jnp.float32)

    @pl.when(k == pl.num_programs(2) - 1)
    def _():
        o_ref[...] = (acc_ref[...] + b_ref[...]).astype(o_ref.dtype)


def _pick_tile(dim, desired, align):
    """Largest `align`-multiple tile <= desired that divides dim, else full dim."""
    if dim <= desired:
        return dim
    t = (min(desired, dim) // align) * align
    while t >= align:
        if dim % t == 0:
            return t
        t -= align
    return dim


def linear(x, w_t, b, *, tm=256, tn=256, tk=256):
    """x: (M, K), w_t: (K, N) [already W^T], b: (1, N) -> (M, N)."""
    M, K = x.shape
    N = w_t.shape[1]
    tm = _pick_tile(M, tm, 8)     # sublane-aligned (or full)
    tk = _pick_tile(K, tk, 128)   # lane-aligned (or full)
    tn = _pick_tile(N, tn, 128)   # lane-aligned (or full)
    grid = (M // tm, N // tn, K // tk)

    return pl.pallas_call(
        _linear_kernel,
        out_shape=jax.ShapeDtypeStruct((M, N), x.dtype),
        grid_spec=pltpu.PrefetchScalarGridSpec(
            num_scalar_prefetch=0,
            grid=grid,
            in_specs=[
                pl.BlockSpec((tm, tk), lambda i, j, k: (i, k)),
                pl.BlockSpec((tk, tn), lambda i, j, k: (k, j)),
                pl.BlockSpec((1, tn), lambda i, j, k: (0, j)),
            ],
            out_specs=pl.BlockSpec((tm, tn), lambda i, j, k: (i, j)),
            scratch_shapes=[pltpu.VMEM((tm, tn), jnp.float32)],
        ),
        compiler_params=pltpu.CompilerParams(
            dimension_semantics=("parallel", "parallel", "arbitrary"),
            vmem_limit_bytes=32 * 1024 * 1024,  # safe on v7x (64 MiB phys)
        ),
    )(x, w_t, b)


# ----------------------------------------------------------------------------
# Attention core: one batch (all heads) per grid step, lane-dense output
# ----------------------------------------------------------------------------
def _mha_kernel(qkv_ref, o_ref, *, num_heads, head_dim, embed_dim):
    E, H, D = embed_dim, num_heads, head_dim
    qkv = qkv_ref[0]                      # (L, 3E): [q | k | v] along lanes

    # Contract last dims directly (no k.T transpose materialized).
    dn_qk = (((1,), (1,)), ((), ()))      # (L,D) x (S,D) -> (L,S)
    dn_pv = (((1,), (0,)), ((), ()))      # (L,S) x (S,D) -> (L,D)

    outs = []
    for h in range(H):                    # H is small & static -> unrolled
        q_h = qkv[:, h * D:(h + 1) * D]               # scaling pre-folded
        k_h = qkv[:, E + h * D:E + (h + 1) * D]
        v_h = qkv[:, 2 * E + h * D:2 * E + (h + 1) * D]

        s = lax.dot_general(q_h, k_h, dn_qk,
                            preferred_element_type=jnp.float32)   # (L, S)
        m = jnp.max(s, axis=-1, keepdims=True)
        p = jnp.exp(s - m)
        p = p * pl.reciprocal(jnp.sum(p, axis=-1, keepdims=True), approx=True)
        o_h = lax.dot_general(p.astype(v_h.dtype), v_h, dn_pv,
                              preferred_element_type=jnp.float32)  # (L, D)
        outs.append(o_h)

    # Single lane-dense (L, E) store instead of H masked (L, 8) stores.
    o_ref[0] = jnp.concatenate(outs, axis=-1).astype(o_ref.dtype)


def attention_core(qkv, embed_dim, num_heads):
    """qkv: (B, L, 3E) fused projections -> (B, L, E) attention output."""
    B, L, E3 = qkv.shape
    E = embed_dim
    D = E // num_heads
    # TODO(synk): for long sequences add a KV grid axis with online softmax
    # (flash pattern) instead of holding the full (L, S) score tile per batch.
    return pl.pallas_call(
        functools.partial(_mha_kernel, num_heads=num_heads,
                          head_dim=D, embed_dim=E),
        out_shape=jax.ShapeDtypeStruct((B, L, E), qkv.dtype),
        grid_spec=pltpu.PrefetchScalarGridSpec(
            num_scalar_prefetch=0,
            grid=(B,),
            in_specs=[pl.BlockSpec((1, L, E3), lambda b: (b, 0, 0))],
            out_specs=pl.BlockSpec((1, L, E), lambda b: (b, 0, 0)),
        ),
        compiler_params=pltpu.CompilerParams(
            dimension_semantics=("parallel",),
            vmem_limit_bytes=32 * 1024 * 1024,
        ),
    )(qkv)


# ----------------------------------------------------------------------------
# Module wrapper (glue in plain JAX)
# ----------------------------------------------------------------------------
def multi_head_attention_forward(query, params, num_heads):
    """
    query : (tgt_len, bsz, embed_dim) float32
    params: dict with q/k/v/out projection weights (out,in) and biases (out,)
    Returns attn: (tgt_len, bsz, embed_dim)
    """
    L, B, E = query.shape
    H = num_heads
    D = E // H
    scaling = D ** (-0.5)

    # Single layout change at the boundary; all subsequent reshapes are views.
    x2d = query.transpose(1, 0, 2).reshape(B * L, E)

    # Fused QKV projection; q scaling folded into q's weight & bias
    # ((xW^T + b) * s == x(W^T s) + b s, matching torch's `q *= scaling`).
    w_qkv = jnp.concatenate(
        [params["q_w"].T * scaling, params["k_w"].T, params["v_w"].T], axis=1)  # (E, 3E)
    b_qkv = jnp.concatenate(
        [params["q_b"] * scaling, params["k_b"], params["v_b"]])[None, :]       # (1, 3E)

    qkv = linear(x2d, w_qkv, b_qkv)               # (B*L, 3E)
    qkv = qkv.reshape(B, L, 3 * E)

    attn = attention_core(qkv, E, H)              # (B, L, E)

    out = linear(attn.reshape(B * L, E),
                 params["o_w"].T, params["o_b"][None, :])   # (B*L, E)
    return out.reshape(B, L, E).transpose(1, 0, 2)           # (L, B, E)


def reference_forward(query, params, num_heads):
    """Pure-JAX mirror of the PyTorch forward (for correctness check)."""
    L, B, E = query.shape
    H = num_heads
    D = E // H
    scaling = D ** (-0.5)
    x2d = query.reshape(L * B, E)
    q = (x2d @ params["q_w"].T + params["q_b"]) * scaling
    k = x2d @ params["k_w"].T + params["k_b"]
    v = x2d @ params["v_w"].T + params["v_b"]
    q = q.reshape(L, B * H, D).transpose(1, 0, 2)
    k = k.reshape(L, B * H, D).transpose(1, 0, 2)
    v = v.reshape(L, B * H, D).transpose(1, 0, 2)
    s = jnp.einsum('bld,bsd->bls', q, k)
    p = jax.nn.softmax(s, axis=-1)
    o = jnp.einsum('bls,bsd->bld', p, v)
    o = o.transpose(1, 0, 2).reshape(L * B, E)
    return (o @ params["o_w"].T + params["o_b"]).reshape(L, B, E)


def init_params(key, embed_dim):
    """Deterministic synthetic parameters (torch Linear shapes: W=(out,in))."""
    init_scaling = 1.0 / sqrt(2)

    def xavier(k, shape, gain):
        fan_out, fan_in = shape
        bound = gain * sqrt(6.0 / (fan_in + fan_out))
        return jax.random.uniform(k, shape, jnp.float32, -bound, bound)

    ks = jax.random.split(key, 8)
    E = embed_dim
    lin_bound = 1.0 / sqrt(E)
    params = {
        "q_w": xavier(ks[0], (E, E), init_scaling),
        "k_w": xavier(ks[1], (E, E), init_scaling),
        "v_w": xavier(ks[2], (E, E), init_scaling),
        # NOTE: reference reset_parameters() zero-inits out_proj; we use a
        # non-zero deterministic init so the demo output is non-trivial.
        "o_w": xavier(ks[3], (E, E), init_scaling),
        "q_b": jax.random.uniform(ks[4], (E,), jnp.float32, -lin_bound, lin_bound),
        "k_b": jax.random.uniform(ks[5], (E,), jnp.float32, -lin_bound, lin_bound),
        "v_b": jax.random.uniform(ks[6], (E,), jnp.float32, -lin_bound, lin_bound),
        "o_b": jnp.zeros((E,), jnp.float32),
    }
    return params


if __name__ == "__main__":
    tgt_len, bsz, embed_dim, num_heads = 16, 2, 32, 4

    key = jax.random.PRNGKey(0)
    k_x, k_p = jax.random.split(key)
    query = jax.random.normal(k_x, (tgt_len, bsz, embed_dim), jnp.float32)
    params = init_params(k_p, embed_dim)

    out = multi_head_attention_forward(query, params, num_heads)
    out = jax.block_until_ready(out)
    assert out.shape == (tgt_len, bsz, embed_dim)
    assert bool(jnp.all(jnp.isfinite(out)))

    ref = reference_forward(query, params, num_heads)
    assert bool(jnp.allclose(out, ref, atol=1e-2, rtol=1e-2)), "mismatch vs reference"

    print("KERNEL_OK")
</pallas_src>

<mosaic_0001>
module attributes {stable_mosaic.version = 11 : i64} {
  func.func @_linear_kernel(%arg0: i32, %arg1: i32, %arg2: i32, %arg3: memref<32x32xf32, #tpu.memory_space<vmem>>, %arg4: memref<32x96xf32, #tpu.memory_space<vmem>>, %arg5: memref<1x96xf32, #tpu.memory_space<vmem>>, %arg6: memref<32x96xf32, #tpu.memory_space<vmem>>, %arg7: memref<32x96xf32, #tpu.memory_space<vmem>>) attributes {dimension_semantics = [#tpu.dimension_semantics<parallel>, #tpu.dimension_semantics<parallel>, #tpu.dimension_semantics<arbitrary>], iteration_bounds = array<i64: 1, 1, 1>, scalar_prefetch = 0 : i64, scratch_operands = 1 : i64, tpu.core_type = #tpu.core_type<tc>, window_params = [{transform_indices = @transform_0, window_bounds = array<i64: 32, 32>}, {transform_indices = @transform_1, window_bounds = array<i64: 32, 96>}, {transform_indices = @transform_2, window_bounds = array<i64: 1, 96>}, {transform_indices = @transform_3, window_bounds = array<i64: 32, 96>}]} {
    %c0_i32 = arith.constant 0 : i32
    %0 = arith.cmpi eq, %arg2, %c0_i32 : i32
    %1 = arith.extui %0 : i1 to i32
    %c0_i32_0 = arith.constant 0 : i32
    %2 = arith.cmpi ne, %1, %c0_i32_0 : i32
    scf.if %2 {
      %cst_10 = arith.constant 0.000000e+00 : f32
      %12 = vector.broadcast %cst_10 : f32 to vector<32x96xf32>
      %c0_11 = arith.constant 0 : index
      %c0_12 = arith.constant 0 : index
      %13 = vector.load %arg7[%c0_11, %c0_12] : memref<32x96xf32, #tpu.memory_space<vmem>>, vector<32x96xf32>
      tpu.vector_store %arg7[%c0_11, %c0_12], %12 {strides = array<i32>} : memref<32x96xf32, #tpu.memory_space<vmem>>, vector<32x96xf32>,
    } else {
    }
    %c0 = arith.constant 0 : index
    %c0_1 = arith.constant 0 : index
    %3 = vector.load %arg7[%c0, %c0_1] : memref<32x96xf32, #tpu.memory_space<vmem>>, vector<32x96xf32>
    %c0_2 = arith.constant 0 : index
    %c0_3 = arith.constant 0 : index
    %4 = vector.load %arg3[%c0_2, %c0_3] : memref<32x32xf32, #tpu.memory_space<vmem>>, vector<32x32xf32>
    %c0_4 = arith.constant 0 : index
    %c0_5 = arith.constant 0 : index
    %5 = vector.load %arg4[%c0_4, %c0_5] : memref<32x96xf32, #tpu.memory_space<vmem>>, vector<32x96xf32>
    %cst = arith.constant dense<0.000000e+00> : vector<32x96xf32>
    %6 = tpu.matmul %4, %5, %cst {dimension_numbers = #tpu.dot_dimension_numbers<[1], [0], [0], [1], [0, 0, 1, 1], [], []>} : vector<32x32xf32>, vector<32x96xf32>, vector<32x96xf32> -> vector<32x96xf32>
    %7 = arith.addf %3, %6 : vector<32x96xf32>
    %c0_6 = arith.constant 0 : index
    %c0_7 = arith.constant 0 : index
    %8 = vector.load %arg7[%c0_6, %c0_7] : memref<32x96xf32, #tpu.memory_space<vmem>>, vector<32x96xf32>
    tpu.vector_store %arg7[%c0_6, %c0_7], %7 {strides = array<i32>} : memref<32x96xf32, #tpu.memory_space<vmem>>, vector<32x96xf32>,
    %c0_i32_8 = arith.constant 0 : i32
    %9 = arith.cmpi eq, %arg2, %c0_i32_8 : i32
    %10 = arith.extui %9 : i1 to i32
    %c0_i32_9 = arith.constant 0 : i32
    %11 = arith.cmpi ne, %10, %c0_i32_9 : i32
    scf.if %11 {
      %c0_10 = arith.constant 0 : index
      %c0_11 = arith.constant 0 : index
      %12 = vector.load %arg7[%c0_10, %c0_11] : memref<32x96xf32, #tpu.memory_space<vmem>>, vector<32x96xf32>
      %c0_12 = arith.constant 0 : index
      %c0_13 = arith.constant 0 : index
      %13 = vector.load %arg5[%c0_12, %c0_13] : memref<1x96xf32, #tpu.memory_space<vmem>>, vector<1x96xf32>
      %14 = vector.broadcast %13 : vector<1x96xf32> to vector<32x96xf32>
      %15 = arith.addf %12, %14 : vector<32x96xf32>
      %c0_14 = arith.constant 0 : index
      %c0_15 = arith.constant 0 : index
      %16 = vector.load %arg6[%c0_14, %c0_15] : memref<32x96xf32, #tpu.memory_space<vmem>>, vector<32x96xf32>
      tpu.vector_store %arg6[%c0_14, %c0_15], %15 {strides = array<i32>} : memref<32x96xf32, #tpu.memory_space<vmem>>, vector<32x96xf32>,
    } else {
    }
    return
  }
  func.func @transform_0(%arg0: i32, %arg1: i32, %arg2: i32) -> (i32, i32) {
    %c0_i32 = arith.constant 0 : i32
    return %arg0, %arg2 : i32, i32
  }
  func.func @transform_1(%arg0: i32, %arg1: i32, %arg2: i32) -> (i32, i32) {
    %c0_i32 = arith.constant 0 : i32
    return %arg2, %arg1 : i32, i32
  }
  func.func @transform_2(%arg0: i32, %arg1: i32, %arg2: i32) -> (i32, i32) {
    %c0_i32 = arith.constant 0 : i32
    %c0_i32_0 = arith.constant 0 : i32
    return %c0_i32, %arg1 : i32, i32
  }
  func.func @transform_3(%arg0: i32, %arg1: i32, %arg2: i32) -> (i32, i32) {
    %c0_i32 = arith.constant 0 : i32
    return %arg0, %arg1 : i32, i32
  }
}

</mosaic_0001>

<llo_original>
// kernel: tpu_custom_call.1
$region0: #{tpu_custom_call.1}
  #allocation0 [shape = 'u32[]', space=smem, size = 0x4, offset = 0x4, fixed_abs, tag = 'smem constant byte address 0x4 - core index']
  #allocation1 [shape = 'u32[144,128]{1,0:T(1,128)}', space=vmem, size = 0x12000, scoped, tag = 'internal scratch']
  #allocation2 [shape = 'f32[32,96]{1,0:T(8,128)}', space=vmem, size = 0x4000, scoped, tag = 'scratch operand']
  %s0 = inlined_call_operand.hbm [shape: f32[32,32], index: 0, kind: input, shape index: {}]
  %s1 = inlined_call_operand.hbm [shape: f32[32,96], index: 1, kind: input, shape index: {}]
  %s2 = inlined_call_operand.vmem [shape: f32[1,96], index: 2, kind: input, shape index: {}]
  %s3 = inlined_call_operand.hbm [shape: f32[32,96], index: 3, kind: output, shape index: {}]
  %s4 = sld [smem:[#allocation0]]
  $region38: #{tpu_custom_call.1} parent=0
    _
  %s6 = ssub.s32 1, %s4
  %s7 = scalar_select 0, %s6, %s4
  $region1: #{tpu_custom_call.1} parent=0
    #allocation3 [shape = 'u8[16384]{0}', space=vmem, size = 0x4000, scoped, tag = 'input window, operand 0, single buffered']
    #allocation4 [shape = 's32[1]{0}', space=sflag, size = 0x4, scoped, tag = 'scoped memory for tpu_custom_call.1']
    #allocation5 [shape = 's32[1]{0}', space=sflag, size = 0x4, scoped, tag = 'scoped memory for tpu_custom_call.1']
    #allocation6 [shape = 'u8[16384]{0}', space=vmem, size = 0x4000, scoped, tag = 'input window, operand 1, single buffered']
    #allocation7 [shape = 's32[1]{0}', space=sflag, size = 0x4, scoped, tag = 'scoped memory for tpu_custom_call.1']
    #allocation8 [shape = 'u8[16384]{0}', space=vmem, size = 0x4000, scoped, tag = 'output window, operand 0, single buffered']
    %8 = vsyncpa [#allocation4], 0
    %9 = vsyncpa [#allocation7], 0
    %10 = vsyncpa [#allocation5], 0
    // Predicated region
    $region2: #{tpu_custom_call.1} parent=1 // pred_check
      _
    $region3: #{tpu_custom_call.1} parent=1 // pred_check_branch
      %12 = sbr.rel (0) target = $region5
    $region4: #{tpu_custom_call.1} parent=1 // pred_region
      %s14 = ssub.s32 512, 512
      %15 = vsyncadd [#allocation4], %s14
      %s16 = sshll.u32 [#allocation3], 4
      %s17 = int_to_ptr.vmem [resolvable:$true] %s16
      %22 = dma.hbm_to_vmem [thread:$0]  %s0, 512, %s17, [#allocation4], 128, 128, 8
    $region5: #{tpu_custom_call.1} parent=1 // pred_fallthru
      _
    // Predicated region
    $region6: #{tpu_custom_call.1} parent=1 // pred_check
      _
    $region7: #{tpu_custom_call.1} parent=1 // pred_check_branch
      %24 = sbr.rel (0) target = $region9
    $region8: #{tpu_custom_call.1} parent=1 // pred_region
      %s26 = ssub.s32 512, 512
      %27 = vsyncadd [#allocation7], %s26
      %s28 = sshll.u32 [#allocation6], 4
      %s29 = int_to_ptr.vmem [resolvable:$true] %s28
      %34 = dma.hbm_to_vmem [thread:$0]  %s1, 512, %s29, [#allocation7], 128, 128, 8
    $region9: #{tpu_custom_call.1} parent=1 // pred_fallthru
      _
    // Predicated region
    $region10: #{tpu_custom_call.1} parent=1 // pred_check
      _
    $region11: #{tpu_custom_call.1} parent=1 // pred_check_branch
      %36 = sbr.rel (0) target = $region13
    $region12: #{tpu_custom_call.1} parent=1 // pred_region
      _
    $region13: #{tpu_custom_call.1} parent=1 // pred_fallthru
      _
    // Predicated region
    $region14: #{tpu_custom_call.1} parent=1 // pred_check
      _
    $region15: #{tpu_custom_call.1} parent=1 // pred_check_branch
      %38 = sbr.rel (0) target = $region17
    $region16: #{tpu_custom_call.1} parent=1 // pred_region
      %39 = dma.done [#allocation4], 512
    $region17: #{tpu_custom_call.1} parent=1 // pred_fallthru
      _
    // Predicated region
    $region18: #{tpu_custom_call.1} parent=1 // pred_check
      _
    $region19: #{tpu_custom_call.1} parent=1 // pred_check_branch
      %41 = sbr.rel (0) target = $region21
    $region20: #{tpu_custom_call.1} parent=1 // pred_region
      %42 = dma.done [#allocation7], 512
    $region21: #{tpu_custom_call.1} parent=1 // pred_fallthru
      _
    %p43 = scmp.eq.s32.totalorder 0, 0
    // Predicated region
    $region22: #{tpu_custom_call.1} parent=1 // pred_check
      %p44 = pneg %p43
    $region23: #{tpu_custom_call.1} parent=1 // pred_check_branch
      %46 = sbr.rel (%p44) target = $region25
    $region24: #{tpu_custom_call.1} parent=1 // pred_region
      %vm47 = vcmask 785408
      %48 = vst.msk [vmem:[#allocation2] sm:$0xff] %vm47, 0.0
      %49 = vst.msk [vmem:[#allocation2 + $0x8] sm:$0xff] %vm47, 0.0
      %50 = vst.msk [vmem:[#allocation2 + $0x10] sm:$0xff] %vm47, 0.0
      %51 = vst.msk [vmem:[#allocation2 + $0x18] sm:$0xff] %vm47, 0.0
    $region25: #{tpu_custom_call.1} parent=1 // pred_fallthru
      _
    %v52 = vld [vmem:[#allocation2] sm:$0xff]
    %v53 = vld [vmem:[#allocation2 + $0x8] sm:$0xff]
    %v54 = vld [vmem:[#allocation2 + $0x10] sm:$0xff]
    %v55 = vld [vmem:[#allocation2 + $0x18] sm:$0xff]
    %v56 = vld [vmem:[#allocation3] sm:$0xff]
    %v57 = vld [vmem:[#allocation3 + $0x8] sm:$0xff]
    %v58 = vld [vmem:[#allocation3 + $0x10] sm:$0xff]
    %v59 = vld [vmem:[#allocation3 + $0x18] sm:$0xff]
    %v60 = vld [vmem:[#allocation6] sm:$0xff]
    %v61 = vld [vmem:[#allocation6 + $0x8] sm:$0xff]
    %v62 = vld [vmem:[#allocation6 + $0x10] sm:$0xff]
    %v63 = vld [vmem:[#allocation6 + $0x18] sm:$0xff]
    %vm64 = vcmask 261120
    %v66 = vsel %vm64, %v56, 0
    %v69 = vsel %vm64, %v57, 0
    %v72 = vsel %vm64, %v58, 0
    %v75 = vsel %vm64, %v59, 0
    %77 = vmatprep.subr.mxu0 0.0
    %78 = vmatpush1.msra.mxu0 0.0
    %79 = vmatprep.subr.mxu0 0.0
    %80 = vmatpush1.msra.mxu0 0.0
    %81 = vmatprep.subr.mxu0 0.0
    %82 = vmatpush1.msra.mxu0 0.0
    %83 = vmatprep.subr.mxu0 0.0
    %84 = vmatpush1.msra.mxu0 0.0
    %85 = vmatprep.subr.mxu0 0.0
    %86 = vmatpush1.msra.mxu0 0.0
    %87 = vmatprep.subr.mxu0 0.0
    %88 = vmatpush1.msra.mxu0 0.0
    %89 = vmatprep.subr.mxu0 0.0
    %90 = vmatpush1.msra.mxu0 0.0
    %91 = vmatprep.subr.mxu0 0.0
    %92 = vmatpush1.msra.mxu0 0.0
    %93 = vmatprep.subr.mxu0 0.0
    %94 = vmatpush1.msra.mxu0 0.0
    %95 = vmatprep.subr.mxu0 0.0
    %96 = vmatpush1.msra.mxu0 0.0
    %97 = vmatprep.subr.mxu0 0.0
    %98 = vmatpush1.msra.mxu0 0.0
    %99 = vmatprep.subr.mxu0 0.0
    %100 = vmatpush1.msra.mxu0 0.0
    %101 = vmatprep.subr.mxu0 0.0
    %102 = vmatpush1.msra.mxu0 %v63
    %103 = vmatprep.subr.mxu0 0.0
    %104 = vmatpush1.msra.mxu0 %v62
    %105 = vmatprep.subr.mxu0 0.0
    %106 = vmatpush1.msra.mxu0 %v61
    %107 = vmatprep.subr.mxu0 0.0
    %108 = vmatpush1.msra.mxu0 %v60
    %109 = vmatprep.subr.mxu0 0.0
    %110 = vmatpush2.msra.mxu0 0.0
    %111 = vmatprep.subr.mxu0 0.0
    %112 = vmatpush2.msra.mxu0 0.0
    %113 = vmatprep.subr.mxu0 0.0
    %114 = vmatpush2.msra.mxu0 0.0
    %115 = vmatprep.subr.mxu0 0.0
    %116 = vmatpush2.msra.mxu0 0.0
    %117 = vmatprep.subr.mxu0 0.0
    %118 = vmatpush2.msra.mxu0 0.0
    %119 = vmatprep.subr.mxu0 0.0
    %120 = vmatpush2.msra.mxu0 0.0
    %121 = vmatprep.subr.mxu0 0.0
    %122 = vmatpush2.msra.mxu0 0.0
    %123 = vmatprep.subr.mxu0 0.0
    %124 = vmatpush2.msra.mxu0 0.0
    %125 = vmatprep.subr.mxu0 0.0
    %126 = vmatpush2.msra.mxu0 0.0
    %127 = vmatprep.subr.mxu0 0.0
    %128 = vmatpush2.msra.mxu0 0.0
    %129 = vmatprep.subr.mxu0 0.0
    %130 = vmatpush2.msra.mxu0 0.0
    %131 = vmatprep.subr.mxu0 0.0
    %132 = vmatpush2.msra.mxu0 0.0
    %133 = vmatprep.subr.mxu0 0.0
    %134 = vmatpush2.msra.mxu0 0.0
    %135 = vmatprep.subr.mxu0 0.0
    %136 = vmatpush2.msra.mxu0 0.0
    %137 = vmatprep.subr.mxu0 0.0
    %138 = vmatpush2.msra.mxu0 0.0
    %139 = vmatprep.subr.mxu0 0.0
    %140 = vmatpush2.msra.mxu0 0.0
    %141 = vmatprep.mubr.f32.mxu0 0.0
    %142 = vmatmul.mubr.f32.gmra.mxu0 %v66
    %v143 = vpop.f32.mrf.mxu0
    %v144 = vadd.f32 0.0, %v143
    %v145 = vpop.f32.mrf.mxu0
    %146 = vmatprep.mubr.f32.mxu0 0.0
    %147 = vmatmul.mubr.f32.gmra.mxu0 %v69
    %v148 = vpop.f32.mrf.mxu0
    %v149 = vadd.f32 0.0, %v148
    %v150 = vpop.f32.mrf.mxu0
    %151 = vmatprep.mubr.f32.mxu0 0.0
    %152 = vmatmul.mubr.f32.gmra.mxu0 %v72
    %v153 = vpop.f32.mrf.mxu0
    %v154 = vadd.f32 0.0, %v153
    %v155 = vpop.f32.mrf.mxu0
    %156 = vmatprep.mubr.f32.mxu0 0.0
    %157 = vmatmul.mubr.f32.gmra.mxu0 %v75
    %v158 = vpop.f32.mrf.mxu0
    %v159 = vadd.f32 0.0, %v158
    %v160 = vpop.f32.mrf.mxu0
    %161 = vdwg.mxu0
    %v162 = vadd.f32 %v52, %v144
    %v163 = vadd.f32 %v53, %v149
    %v164 = vadd.f32 %v54, %v154
    %v165 = vadd.f32 %v55, %v159
    %vm166 = vcmask 785408
    %167 = vst.msk [vmem:[#allocation2] sm:$0xff] %vm166, %v162
    %168 = vst.msk [vmem:[#allocation2 + $0x8] sm:$0xff] %vm166, %v163
    %169 = vst.msk [vmem:[#allocation2 + $0x10] sm:$0xff] %vm166, %v164
    %170 = vst.msk [vmem:[#allocation2 + $0x18] sm:$0xff] %vm166, %v165
    // Predicated region
    $region26: #{tpu_custom_call.1} parent=1 // pred_check
      %p171 = pneg %p43
    $region27: #{tpu_custom_call.1} parent=1 // pred_check_branch
      %173 = sbr.rel (%p171) target = $region29
    $region28: #{tpu_custom_call.1} parent=1 // pred_region
      %v174 = vld [vmem:[#allocation2] sm:$0xff]
      %v175 = vld [vmem:[#allocation2 + $0x8] sm:$0xff]
      %v176 = vld [vmem:[#allocation2 + $0x10] sm:$0xff]
      %v177 = vld [vmem:[#allocation2 + $0x18] sm:$0xff]
      %v178 = vld [vmem:[%s2] sm:$0x1]
      %v180 = vlaneseq
      %v181 = vshrl.u32 %v180, 7
      %v182 = vsub.s32 0, %v181
      %v183 = vrot.slane %v178, %v182
      %v185 = vadd.f32 %v174, %v183
      %v186 = vadd.f32 %v175, %v183
      %v187 = vadd.f32 %v176, %v183
      %v188 = vadd.f32 %v177, %v183
      %189 = vst.msk [vmem:[#allocation8] sm:$0xff] %vm166, %v185
      %190 = vst.msk [vmem:[#allocation8 + $0x8] sm:$0xff] %vm166, %v186
      %191 = vst.msk [vmem:[#allocation8 + $0x10] sm:$0xff] %vm166, %v187
      %192 = vst.msk [vmem:[#allocation8 + $0x18] sm:$0xff] %vm166, %v188
    $region29: #{tpu_custom_call.1} parent=1 // pred_fallthru
      _
    // Predicated region
    $region30: #{tpu_custom_call.1} parent=1 // pred_check
      _
    $region31: #{tpu_custom_call.1} parent=1 // pred_check_branch
      %194 = sbr.rel (0) target = $region33
    $region32: #{tpu_custom_call.1} parent=1 // pred_region
      %s196 = ssub.s32 512, 512
      %197 = vsyncadd [#allocation5], %s196
      %s198 = sshll.u32 [#allocation8], 4
      %s199 = int_to_ptr.vmem [resolvable:$true] %s198
      %204 = dma.vmem_to_hbm [thread:$0]  %s199, 512, %s3, [#allocation5], 128, 128, 8
    $region33: #{tpu_custom_call.1} parent=1 // pred_fallthru
      _
    // Predicated region
    $region34: #{tpu_custom_call.1} parent=1 // pred_check
      _
    $region35: #{tpu_custom_call.1} parent=1 // pred_check_branch
      %206 = sbr.rel (0) target = $region37
    $region36: #{tpu_custom_call.1} parent=1 // pred_region
      %207 = dma.done [#allocation5], 512
    $region37: #{tpu_custom_call.1} parent=1 // pred_fallthru
      _
    %208 = vsyncpa [#allocation4], 1
    %209 = vsyncpa [#allocation7], 1
    %210 = vsyncpa [#allocation5], 1

</llo_original>
